<compile_context>
chip_gen: v7x
topology: tpu7x:2x2x1
jax: 0.10.0
libtpu: 0.0.40
codegen_flags: <defaults>
</compile_context>

<pallas_src>
import functools
import math

import jax
import jax.numpy as jnp
from jax.experimental import pallas as pl
from jax.experimental.pallas import tpu as pltpu

_EPS = 1e-6
_LANES = 128          # lane-dense layout: last dim of every block = vreg lanes


def _cdiv(a, b):
    return -(-a // b)


def _round_up(a, b):
    return _cdiv(a, b) * b


def _sublane_multiple(dtype):
    # Packed sublane tile: (8,128) for 4-byte, (16,128) bf16, (32,128) int8/fp8.
    return {1: 32, 2: 16}.get(jnp.dtype(dtype).itemsize, 8)


def _cluster_loss_kernel(t_ref, p_ref, o_ref, acc_ref, *,
                         steps_per_core, steps_total, block_rows, tail_limit):
    core = pl.program_id(0)            # "parallel" axis (split across TCs on v7x)
    step = pl.program_id(1)            # "arbitrary" reduction axis
    b = core * steps_per_core + step   # global block id (may be a ghost block)

    @pl.when(step == 0)
    def _init():
        acc_ref[...] = jnp.zeros_like(acc_ref)

    # Native-dtype HBM -> in-kernel f32 cast (halves HBM traffic for bf16).
    t = t_ref[...].astype(jnp.float32)
    p = p_ref[...].astype(jnp.float32)
    # log-difference form: no VPU Newton-refined divide (2 EUP logs instead of
    # log + reciprocal).  target == 0 still gives 0 * (-inf) = NaN, matching
    # the PyTorch reference.
    val = t * (jnp.log(t) - jnp.log(p + jnp.float32(_EPS)))

    if steps_total > 1:
        # Interior blocks are fully valid: fold the (block_rows, 128) tile into
        # the single vreg-sized (8, 128) accumulator.  The reshape is
        # vreg-aligned (groups of 8 consecutive rows), so this lowers to pure
        # VALU adds with no relayout and no full-tile accumulator RMW.
        @pl.when(b < steps_total - 1)
        def _interior():
            acc_ref[...] += jnp.sum(
                val.reshape(block_rows // 8, 8, _LANES), axis=0)

    # Tail block (exactly one per call): mask padded / out-of-bounds elements
    # (only when any exist - decided statically), reduce, fold into one acc
    # row.  Ghost blocks (b >= steps_total, only when the grid is rounded up
    # for the 2-core split) skip both branches and contribute nothing.
    @pl.when(b == steps_total - 1)
    def _tail():
        v = val
        if tail_limit < block_rows * _LANES:        # static: padding/OOB exists
            idx = (jax.lax.broadcasted_iota(jnp.int32, v.shape, 0) * _LANES
                   + jax.lax.broadcasted_iota(jnp.int32, v.shape, 1))
            # Select (not multiply-by-mask) so NaN/-inf in padded or garbage
            # lanes is discarded.  idx < block_rows*128 << 2^31 -> no overflow.
            v = jnp.where(idx < tail_limit, v, jnp.float32(0.0))
        acc_ref[0:1, :] += jnp.sum(v, axis=0, keepdims=True)

    @pl.when(step == steps_per_core - 1)
    def _finalize():
        o_ref[0] = acc_ref[...]


def cluster_loss(target, pred, *, block_rows=4096, num_cores=2):
    """Pallas TPU implementation of ClusterLoss.forward(target, pred)."""
    assert target.shape == pred.shape
    n_rows = math.prod(target.shape[:-1])   # rows averaged over (ndim==1 -> 1)
    n_valid = target.size

    # Lane-dense layout: flatten, retile as (rows, 128).
    tf = target.reshape(-1)
    pf = pred.reshape(-1)

    # Pad only to lane granularity, and only when needed (numel % 128 != 0).
    # TODO(synk): this pad is still a full HBM copy for such ragged sizes; the
    # common (numel % 128 == 0) case has no pad and no copy.
    pad = (-n_valid) % _LANES
    if pad:
        tf = jnp.pad(tf, (0, pad))   # zeros; masked inside the kernel
        pf = jnp.pad(pf, (0, pad))
    r_arr = (n_valid + pad) // _LANES
    t2 = tf.reshape(r_arr, _LANES)
    p2 = pf.reshape(r_arr, _LANES)

    sub = max(_sublane_multiple(target.dtype), _sublane_multiple(pred.dtype))

    if r_arr <= block_rows:
        # Tiny problem: one block spanning the whole array (full-extent block
        # dims are always legal, regardless of sublane packing).
        br = max(r_arr, 1)
        steps_total = 1
    else:
        br = _round_up(block_rows, sub)
        steps_total = _cdiv(r_arr, br)

    n_cores = num_cores if steps_total >= num_cores else 1
    spc = _cdiv(steps_total, n_cores)
    # Number of valid elements inside the (possibly partial) last block.
    tail_limit = n_valid - (steps_total - 1) * br * _LANES

    kernel = functools.partial(
        _cluster_loss_kernel,
        steps_per_core=spc, steps_total=steps_total,
        block_rows=br, tail_limit=tail_limit)

    def in_map(c, s):
        # Clamp so ghost blocks (rounded-up grid) never index out of bounds;
        # the kernel skips their accumulation.
        return (jnp.minimum(c * spc + s, steps_total - 1), 0)

    # Raise the scoped-VMEM allowance only when a caller asks for blocks the
    # 16 MiB default (v5e) cannot hold; the default 4096-row blocks fit.
    vmem_needed = 2 * br * _LANES * (target.dtype.itemsize
                                     + pred.dtype.itemsize) + (2 << 20)
    vmem_limit = vmem_needed if vmem_needed > (16 << 20) else None

    cost = pl.CostEstimate(
        flops=5 * n_valid,
        transcendentals=2 * n_valid,
        bytes_accessed=n_valid * (target.dtype.itemsize + pred.dtype.itemsize)
        + n_cores * 8 * 128 * 4)

    out = pl.pallas_call(
        kernel,
        out_shape=jax.ShapeDtypeStruct((n_cores, 8, 128), jnp.float32),
        grid_spec=pltpu.PrefetchScalarGridSpec(
            num_scalar_prefetch=0,
            grid=(n_cores, spc),
            in_specs=[pl.BlockSpec((br, _LANES), in_map),
                      pl.BlockSpec((br, _LANES), in_map)],
            out_specs=pl.BlockSpec((1, 8, 128), lambda c, s: (c, 0, 0)),
            scratch_shapes=[pltpu.VMEM((8, 128), jnp.float32)],
        ),
        compiler_params=pltpu.CompilerParams(
            dimension_semantics=("parallel", "arbitrary"),
            vmem_limit_bytes=vmem_limit),
        cost_estimate=cost,
    )(t2, p2)

    # One (8,128) partial per core; combine + mean over leading dims.
    return jnp.sum(out) / jnp.float32(n_rows)


def cluster_loss_ref(target, pred):
    """Pure-JAX reference (mirrors the PyTorch forward)."""
    return jnp.mean(jnp.sum(target * jnp.log(target / (pred + 1e-6)), axis=-1))


if __name__ == "__main__":
    key = jax.random.PRNGKey(0)

    def make(shape, k, dtype=jnp.float32):
        k1, k2 = jax.random.split(k)
        t = jax.nn.softmax(jax.random.normal(k1, shape, jnp.float32), axis=-1)
        p = jax.nn.softmax(jax.random.normal(k2, shape, jnp.float32), axis=-1)
        return t.astype(dtype), p.astype(dtype)

    k1, k2, k3, k4 = jax.random.split(key, 4)

    # Case 1: canonical clustering head, 256 samples x 16 clusters ->
    # single lane-dense block, no padding, no masking.
    t, p = make((256, 16), k1)
    out = cluster_loss(t, p)
    jax.block_until_ready(out)
    ref = cluster_loss_ref(t, p)
    assert jnp.allclose(out, ref, rtol=1e-5, atol=1e-5), (out, ref)

    # Case 2: ragged numel (4*37*19 = 2812, not a multiple of 128) ->
    # exercises the minimal lane pad and the in-kernel tail masking.
    t, p = make((4, 37, 19), k2)
    out = cluster_loss(t, p)
    ref = cluster_loss_ref(t, p)
    assert jnp.allclose(out, ref, rtol=1e-5, atol=1e-5), (out, ref)

    # Case 3: small block_rows -> multi-step grid, 2-way "parallel" axis,
    # a partial (masked) tail block and one skipped ghost block.
    t, p = make((512, 24), k3)
    out = cluster_loss(t, p, block_rows=40)
    ref = cluster_loss_ref(t, p)
    assert jnp.allclose(out, ref, rtol=1e-5, atol=1e-5), (out, ref)

    # Case 4: bf16 inputs stay bf16 in HBM (f32 cast inside the kernel),
    # multi-block grid with 16-row sublane packing.
    tb, pb = make((512, 24), k4, jnp.bfloat16)
    out = cluster_loss(tb, pb, block_rows=32)
    ref = cluster_loss_ref(tb.astype(jnp.float32), pb.astype(jnp.float32))
    assert jnp.allclose(out, ref, rtol=1e-4, atol=1e-4), (out, ref)

    jax.block_until_ready(out)
    print("KERNEL_OK")
</pallas_src>

<mosaic_0001>
module attributes {stable_mosaic.version = 11 : i64} {
  func.func @_cluster_loss_kernel(%arg0: i32, %arg1: i32, %arg2: memref<32x128xf32, #tpu.memory_space<vmem>>, %arg3: memref<32x128xf32, #tpu.memory_space<vmem>>, %arg4: memref<1x8x128xf32, #tpu.memory_space<vmem>>, %arg5: memref<8x128xf32, #tpu.memory_space<vmem>>) attributes {dimension_semantics = [#tpu.dimension_semantics<parallel>, #tpu.dimension_semantics<arbitrary>], iteration_bounds = array<i64: 1, 1>, scalar_prefetch = 0 : i64, scratch_operands = 1 : i64, tpu.core_type = #tpu.core_type<tc>, window_params = [{transform_indices = @transform_0, window_bounds = array<i64: 32, 128>}, {transform_indices = @transform_1, window_bounds = array<i64: 32, 128>}, {transform_indices = @transform_2, window_bounds = array<i64: 1, 8, 128>}]} {
    %c1_i32 = arith.constant 1 : i32
    %0 = arith.muli %arg0, %c1_i32 : i32
    %1 = arith.addi %0, %arg1 : i32
    %c0_i32 = arith.constant 0 : i32
    %2 = arith.cmpi eq, %arg1, %c0_i32 : i32
    %3 = arith.extui %2 : i1 to i32
    %c0_i32_0 = arith.constant 0 : i32
    %4 = arith.cmpi ne, %3, %c0_i32_0 : i32
    scf.if %4 {
      %cst_8 = arith.constant 0.000000e+00 : f32
      %19 = vector.broadcast %cst_8 : f32 to vector<8x128xf32>
      %c0_9 = arith.constant 0 : index
      %c0_10 = arith.constant 0 : index
      %20 = vector.load %arg5[%c0_9, %c0_10] : memref<8x128xf32, #tpu.memory_space<vmem>>, vector<8x128xf32>
      tpu.vector_store %arg5[%c0_9, %c0_10], %19 {strides = array<i32>} : memref<8x128xf32, #tpu.memory_space<vmem>>, vector<8x128xf32>,
    } else {
    }
    %c0 = arith.constant 0 : index
    %c0_1 = arith.constant 0 : index
    %5 = vector.load %arg2[%c0, %c0_1] : memref<32x128xf32, #tpu.memory_space<vmem>>, vector<32x128xf32>
    %c0_2 = arith.constant 0 : index
    %c0_3 = arith.constant 0 : index
    %6 = vector.load %arg3[%c0_2, %c0_3] : memref<32x128xf32, #tpu.memory_space<vmem>>, vector<32x128xf32>
    %7 = math.log %5 : vector<32x128xf32>
    %cst = arith.constant 9.99999997E-7 : f32
    %8 = vector.broadcast %cst : f32 to vector<32x128xf32>
    %9 = arith.addf %6, %8 : vector<32x128xf32>
    %10 = math.log %9 : vector<32x128xf32>
    %11 = arith.subf %7, %10 : vector<32x128xf32>
    %12 = arith.mulf %5, %11 : vector<32x128xf32>
    %c0_i32_4 = arith.constant 0 : i32
    %13 = arith.cmpi eq, %1, %c0_i32_4 : i32
    %14 = arith.extui %13 : i1 to i32
    %c0_i32_5 = arith.constant 0 : i32
    %15 = arith.cmpi ne, %14, %c0_i32_5 : i32
    scf.if %15 {
      %c0_8 = arith.constant 0 : index
      %c0_9 = arith.constant 0 : index
      %19 = vector.load %arg5[%c0_8, %c0_9] : memref<8x128xf32, #tpu.memory_space<vmem>>, vector<1x128xf32>
      %cst_10 = arith.constant dense<0.000000e+00> : vector<128xf32>
      %20 = vector.multi_reduction <add>, %12, %cst_10 [0] : vector<32x128xf32> to vector<128xf32>
      %21 = vector.shape_cast %20 : vector<128xf32> to vector<1x128xf32>
      %22 = arith.addf %19, %21 : vector<1x128xf32>
      %c0_11 = arith.constant 0 : index
      %c0_12 = arith.constant 0 : index
      %23 = vector.load %arg5[%c0_11, %c0_12] : memref<8x128xf32, #tpu.memory_space<vmem>>, vector<1x128xf32>
      tpu.vector_store %arg5[%c0_11, %c0_12], %22 {strides = array<i32>} : memref<8x128xf32, #tpu.memory_space<vmem>>, vector<1x128xf32>,
    } else {
    }
    %c0_i32_6 = arith.constant 0 : i32
    %16 = arith.cmpi eq, %arg1, %c0_i32_6 : i32
    %17 = arith.extui %16 : i1 to i32
    %c0_i32_7 = arith.constant 0 : i32
    %18 = arith.cmpi ne, %17, %c0_i32_7 : i32
    scf.if %18 {
      %c0_8 = arith.constant 0 : index
      %c0_9 = arith.constant 0 : index
      %19 = vector.load %arg5[%c0_8, %c0_9] : memref<8x128xf32, #tpu.memory_space<vmem>>, vector<8x128xf32>
      %c0_10 = arith.constant 0 : index
      %c0_11 = arith.constant 0 : index
      %c0_12 = arith.constant 0 : index
      %20 = vector.load %arg4[%c0_10, %c0_11, %c0_12] : memref<1x8x128xf32, #tpu.memory_space<vmem>>, vector<1x8x128xf32>
      %21 = vector.shape_cast %20 : vector<1x8x128xf32> to vector<8x128xf32>
      %22 = vector.shape_cast %19 : vector<8x128xf32> to vector<1x8x128xf32>
      tpu.vector_store %arg4[%c0_10, %c0_11, %c0_12], %22 {strides = array<i32>} : memref<1x8x128xf32, #tpu.memory_space<vmem>>, vector<1x8x128xf32>,
    } else {
    }
    return
  }
  func.func @transform_0(%arg0: i32, %arg1: i32) -> (i32, i32) {
    %c1_i32 = arith.constant 1 : i32
    %0 = arith.muli %arg0, %c1_i32 : i32
    %1 = arith.addi %0, %arg1 : i32
    %c0_i32 = arith.constant 0 : i32
    %2 = arith.minsi %1, %c0_i32 : i32
    %c0_i32_0 = arith.constant 0 : i32
    %c0_i32_1 = arith.constant 0 : i32
    return %2, %c0_i32_0 : i32, i32
  }
  func.func @transform_1(%arg0: i32, %arg1: i32) -> (i32, i32) {
    %c1_i32 = arith.constant 1 : i32
    %0 = arith.muli %arg0, %c1_i32 : i32
    %1 = arith.addi %0, %arg1 : i32
    %c0_i32 = arith.constant 0 : i32
    %2 = arith.minsi %1, %c0_i32 : i32
    %c0_i32_0 = arith.constant 0 : i32
    %c0_i32_1 = arith.constant 0 : i32
    return %2, %c0_i32_0 : i32, i32
  }
  func.func @transform_2(%arg0: i32, %arg1: i32) -> (i32, i32, i32) {
    %c0_i32 = arith.constant 0 : i32
    %c0_i32_0 = arith.constant 0 : i32
    %c0_i32_1 = arith.constant 0 : i32
    return %arg0, %c0_i32, %c0_i32_0 : i32, i32, i32
  }
}

</mosaic_0001>

<llo_original>
// kernel: tpu_custom_call.1
$region0: #{tpu_custom_call.1}
  #allocation0 [shape = 'u32[]', space=smem, size = 0x4, offset = 0x4, fixed_abs, tag = 'smem constant byte address 0x4 - core index']
  #allocation1 [shape = 'u32[144,128]{1,0:T(1,128)}', space=vmem, size = 0x12000, scoped, tag = 'internal scratch']
  #allocation2 [shape = 'f32[8,128]{1,0:T(8,128)}', space=vmem, size = 0x1000, scoped, tag = 'scratch operand']
  %s0 = inlined_call_operand.hbm [shape: f32[32,128], index: 0, kind: input, shape index: {}]
  %s1 = inlined_call_operand.hbm [shape: f32[32,128], index: 1, kind: input, shape index: {}]
  %s2 = inlined_call_operand.hbm [shape: f32[1,8,128], index: 2, kind: output, shape index: {}]
  %s3 = sld [smem:[#allocation0]]
  $region38: #{tpu_custom_call.1} parent=0
    _
  %s5 = ssub.s32 1, %s3
  %s6 = scalar_select 0, %s5, %s3
  $region1: #{tpu_custom_call.1} parent=0
    #allocation3 [shape = 'u8[16384]{0}', space=vmem, size = 0x4000, scoped, tag = 'input window, operand 0, single buffered']
    #allocation4 [shape = 's32[1]{0}', space=sflag, size = 0x4, scoped, tag = 'scoped memory for tpu_custom_call.1']
    #allocation5 [shape = 's32[1]{0}', space=sflag, size = 0x4, scoped, tag = 'scoped memory for tpu_custom_call.1']
    #allocation6 [shape = 'u8[16384]{0}', space=vmem, size = 0x4000, scoped, tag = 'input window, operand 1, single buffered']
    #allocation7 [shape = 's32[1]{0}', space=sflag, size = 0x4, scoped, tag = 'scoped memory for tpu_custom_call.1']
    #allocation8 [shape = 'u8[4096]{0}', space=vmem, size = 0x1000, scoped, tag = 'output window, operand 0, single buffered']
    %7 = vsyncpa [#allocation4], 0
    %8 = vsyncpa [#allocation7], 0
    %9 = vsyncpa [#allocation5], 0
    // Predicated region
    $region2: #{tpu_custom_call.1} parent=1 // pred_check
      _
    $region3: #{tpu_custom_call.1} parent=1 // pred_check_branch
      %11 = sbr.rel (0) target = $region5
    $region4: #{tpu_custom_call.1} parent=1 // pred_region
      %s12 = sadd.s32 0, 0
      %p13 = scmp.lt.s32.totalorder %s12, 0
      %s14 = scalar_select %p13, %s12, 0
      %s15 = smul.u32 4, %s14
      %s17 = ssub.s32 512, 512
      %18 = vsyncadd [#allocation4], %s17
      %s19 = smul.addr %s15, 128
      %s20 = scalar_lea.hbm %s0, %s19
      %s21 = sshll.u32 [#allocation3], 4
      %s22 = int_to_ptr.vmem [resolvable:$true] %s21
      %27 = dma.hbm_to_vmem [thread:$0]  %s20, 512, %s22, [#allocation4], 128, 128, 8
    $region5: #{tpu_custom_call.1} parent=1 // pred_fallthru
      _
    // Predicated region
    $region6: #{tpu_custom_call.1} parent=1 // pred_check
      _
    $region7: #{tpu_custom_call.1} parent=1 // pred_check_branch
      %29 = sbr.rel (0) target = $region9
    $region8: #{tpu_custom_call.1} parent=1 // pred_region
      %s30 = sadd.s32 0, 0
      %p31 = scmp.lt.s32.totalorder %s30, 0
      %s32 = scalar_select %p31, %s30, 0
      %s33 = smul.u32 4, %s32
      %s35 = ssub.s32 512, 512
      %36 = vsyncadd [#allocation7], %s35
      %s37 = smul.addr %s33, 128
      %s38 = scalar_lea.hbm %s1, %s37
      %s39 = sshll.u32 [#allocation6], 4
      %s40 = int_to_ptr.vmem [resolvable:$true] %s39
      %45 = dma.hbm_to_vmem [thread:$0]  %s38, 512, %s40, [#allocation7], 128, 128, 8
    $region9: #{tpu_custom_call.1} parent=1 // pred_fallthru
      _
    // Predicated region
    $region10: #{tpu_custom_call.1} parent=1 // pred_check
      _
    $region11: #{tpu_custom_call.1} parent=1 // pred_check_branch
      %47 = sbr.rel (0) target = $region13
    $region12: #{tpu_custom_call.1} parent=1 // pred_region
      %48 = dma.done [#allocation4], 512
    $region13: #{tpu_custom_call.1} parent=1 // pred_fallthru
      _
    // Predicated region
    $region14: #{tpu_custom_call.1} parent=1 // pred_check
      _
    $region15: #{tpu_custom_call.1} parent=1 // pred_check_branch
      %50 = sbr.rel (0) target = $region17
    $region16: #{tpu_custom_call.1} parent=1 // pred_region
      %51 = dma.done [#allocation7], 512
    $region17: #{tpu_custom_call.1} parent=1 // pred_fallthru
      _
    %s52 = sadd.s32 0, 0
    %p53 = scmp.lt.s32.totalorder %s52, 0
    %s54 = scalar_select %p53, %s52, 0
    %s55 = smul.u32 4, %s54
    %s56 = sadd.s32 0, 0
    %p57 = scmp.lt.s32.totalorder %s56, 0
    %s58 = scalar_select %p57, %s56, 0
    %s59 = smul.u32 4, %s58
    %s60 = sadd.s32 0, 0
    %p61 = scmp.eq.s32.totalorder 0, 0
    // Predicated region
    $region18: #{tpu_custom_call.1} parent=1 // pred_check
      %p62 = pneg %p61
    $region19: #{tpu_custom_call.1} parent=1 // pred_check_branch
      %64 = sbr.rel (%p62) target = $region21
    $region20: #{tpu_custom_call.1} parent=1 // pred_region
      %65 = vst [vmem:[#allocation2] sm:$0xff] 0.0
    $region21: #{tpu_custom_call.1} parent=1 // pred_fallthru
      _
    %v66 = vld [vmem:[#allocation3] sm:$0xff]
    %v67 = vld [vmem:[#allocation3 + $0x8] sm:$0xff]
    %v68 = vld [vmem:[#allocation3 + $0x10] sm:$0xff]
    %v69 = vld [vmem:[#allocation3 + $0x18] sm:$0xff]
    %v70 = vld [vmem:[#allocation6] sm:$0xff]
    %v71 = vld [vmem:[#allocation6 + $0x8] sm:$0xff]
    %v72 = vld [vmem:[#allocation6 + $0x10] sm:$0xff]
    %v73 = vld [vmem:[#allocation6 + $0x18] sm:$0xff]
    %v74 = vlog2.pop %v66
    %v75 = vmul.f32 %v74, 0.6931472
    %v76 = vlog2.pop %v67
    %v77 = vmul.f32 %v76, 0.6931472
    %v78 = vlog2.pop %v68
    %v79 = vmul.f32 %v78, 0.6931472
    %v80 = vlog2.pop %v69
    %v81 = vmul.f32 %v80, 0.6931472
    %v82 = vadd.f32 %v70, 1e-06
    %v83 = vadd.f32 %v71, 1e-06
    %v84 = vadd.f32 %v72, 1e-06
    %v85 = vadd.f32 %v73, 1e-06
    %v86 = vlog2.pop %v82
    %v87 = vmul.f32 %v86, 0.6931472
    %v88 = vlog2.pop %v83
    %v89 = vmul.f32 %v88, 0.6931472
    %v90 = vlog2.pop %v84
    %v91 = vmul.f32 %v90, 0.6931472
    %v92 = vlog2.pop %v85
    %v93 = vmul.f32 %v92, 0.6931472
    %v94 = vsub.f32 %v75, %v87
    %v95 = vsub.f32 %v77, %v89
    %v96 = vsub.f32 %v79, %v91
    %v97 = vsub.f32 %v81, %v93
    %v98 = vmul.f32 %v66, %v94
    %v99 = vmul.f32 %v67, %v95
    %v100 = vmul.f32 %v68, %v96
    %v101 = vmul.f32 %v69, %v97
    %p102 = scmp.eq.s32.totalorder %s60, 0
    // Predicated region
    $region22: #{tpu_custom_call.1} parent=1 // pred_check
      %p103 = pneg %p102
    $region23: #{tpu_custom_call.1} parent=1 // pred_check_branch
      %105 = sbr.rel (%p103) target = $region25
    $region24: #{tpu_custom_call.1} parent=1 // pred_region
      %v106 = vld [vmem:[#allocation2] sm:$0x1]
      %v107 = vadd.f32 %v98, %v99
      %v108 = vadd.f32 %v107, %v100
      %v109 = vadd.f32 %v108, %v101
      %v110 = vrot.slane %v109, 4
      %v111 = vadd.f32 %v109, %v110
      %v112 = vrot.slane %v111, 2
      %v113 = vadd.f32 %v111, %v112
      %v114 = vrot.slane %v113, 1
      %v115 = vadd.f32 %v113, %v114
      %v116 = vadd.f32 %v106, %v115
      %117 = vst [vmem:[#allocation2] sm:$0x1] %v116
    $region25: #{tpu_custom_call.1} parent=1 // pred_fallthru
      _
    // Predicated region
    $region26: #{tpu_custom_call.1} parent=1 // pred_check
      %p118 = pneg %p61
    $region27: #{tpu_custom_call.1} parent=1 // pred_check_branch
      %120 = sbr.rel (%p118) target = $region29
    $region28: #{tpu_custom_call.1} parent=1 // pred_region
      %v121 = vld [vmem:[#allocation2] sm:$0xff]
      %122 = vst [vmem:[#allocation8] sm:$0xff] %v121
    $region29: #{tpu_custom_call.1} parent=1 // pred_fallthru
      _
    // Predicated region
    $region30: #{tpu_custom_call.1} parent=1 // pred_check
      _
    $region31: #{tpu_custom_call.1} parent=1 // pred_check_branch
      %124 = sbr.rel (0) target = $region33
    $region32: #{tpu_custom_call.1} parent=1 // pred_region
      %s126 = ssub.s32 128, 128
      %127 = vsyncadd [#allocation5], %s126
      %s129 = sshll.u32 [#allocation8], 4
      %s130 = int_to_ptr.vmem [resolvable:$true] %s129
      %132 = dma.vmem_to_hbm [thread:$0]  %s130, 128, %s2, [#allocation5]
    $region33: #{tpu_custom_call.1} parent=1 // pred_fallthru
      _
    // Predicated region
    $region34: #{tpu_custom_call.1} parent=1 // pred_check
      _
    $region35: #{tpu_custom_call.1} parent=1 // pred_check_branch
      %134 = sbr.rel (0) target = $region37
    $region36: #{tpu_custom_call.1} parent=1 // pred_region
      %135 = dma.done [#allocation5], 128
    $region37: #{tpu_custom_call.1} parent=1 // pred_fallthru
      _
    %136 = vsyncpa [#allocation4], 1
    %137 = vsyncpa [#allocation7], 1
    %138 = vsyncpa [#allocation5], 1

</llo_original>
